<compile_context>
chip_gen: v6e
topology: v6e:2x2x1
jax: 0.10.0
libtpu: 0.0.40
codegen_flags: <defaults>
</compile_context>

<pallas_src>
import functools

import jax
import jax.numpy as jnp
from jax import lax
from jax.experimental import pallas as pl
from jax.experimental.pallas import tpu as pltpu


def _round_up(n, m):
    return ((n + m - 1) // m) * m


def _cdiv(a, b):
    return -(-a // b)


def _club_block_kernel(x_ref, y_ref, yperm_ref,
                       w1_ref, b1_ref, w2_ref, b2_ref,
                       out_ref, *, y_dim, lv_off, n_rows, row_tile):
    # Layer 1, fused mu||logvar branches: [TN, x_dim] @ [x_dim, 2h]   (MXU)
    # x is already streamed in the MXU dtype (bf16 by default) -> no per-elem cast.
    h1 = jnp.maximum(
        jnp.dot(x_ref[...], w1_ref[...], preferred_element_type=jnp.float32)
        + b1_ref[...], 0.0)                                    # [TN, 2h], f32

    # Layer 2, block-diagonal weight: [TN, 2h] @ [2h, 2*lv_off]  (MXU)
    # mu occupies columns [0, y_dim); logvar occupies [lv_off, lv_off+y_dim)
    # with lv_off a multiple of 128 -> both slices start on a lane boundary.
    z2 = (jnp.dot(h1.astype(w2_ref.dtype), w2_ref[...],
                  preferred_element_type=jnp.float32)
          + b2_ref[...])                                       # [TN, 2*lv_off], f32

    mu = z2[:, :y_dim]                                         # [TN, y_dim]
    logvar = jnp.tanh(z2[:, lv_off:lv_off + y_dim])            # [TN, y_dim]
    inv_var = jnp.exp(-logvar)                                 # EUP

    y = y_ref[...]
    yp = yperm_ref[...]
    # positive - negative folded:
    #   exp(-logvar) * ((mu - yp)^2 - (mu - y)^2)
    # = exp(-logvar) * (y - yp) * (2*mu - y - yp)
    contrib = (y - yp) * (2.0 * mu - y - yp) * inv_var         # [TN, y_dim]

    # Mask the ragged tail block (edge-block contents are unspecified) with a
    # select BEFORE the reduction so garbage/NaN rows contribute exactly 0.
    row_ids = (pl.program_id(0) * row_tile
               + lax.broadcasted_iota(jnp.int32, (row_tile, 1), 0))
    contrib = jnp.where(row_ids < n_rows, contrib, 0.0)

    partial = jnp.sum(contrib)                                 # scalar block partial
    out_ref[...] = jnp.full((1, 1, 128), partial, dtype=jnp.float32)


def club_sample_forward(x, y, y_perm, params, *,
                        row_tile=512, mxu_dtype=jnp.bfloat16,
                        pad_logvar_lanes=True):
    """Scalar upper bound, same semantics as CLUBSample.forward (given y_perm)."""
    (w1mu, b1mu, w2mu, b2mu, w1lv, b1lv, w2lv, b2lv) = params

    N, x_dim = x.shape
    y_dim = y.shape[1]
    h = w1mu.shape[1]

    # ---- fuse the two branches into two wide matmuls ----
    W1 = jnp.concatenate([w1mu, w1lv], axis=1).astype(mxu_dtype)      # [x_dim, 2h]
    b1 = jnp.concatenate([b1mu, b1lv], axis=1).astype(jnp.float32)    # [1, 2h]

    # Lane-pad the layer-2 output so the logvar branch starts at a 128-lane
    # boundary (free on v6e/v7x 256-wide MXU; set pad_logvar_lanes=False on v5e).
    # TODO(synk): if h or y_dim grow to >= an MXU tile, split layer 2 back into
    # two separate dots instead of this block-diagonal (zero-padded) weight.
    lv_off = _round_up(y_dim, 128) if pad_logvar_lanes else y_dim
    W2 = jnp.zeros((2 * h, 2 * lv_off), jnp.float32)
    W2 = W2.at[:h, :y_dim].set(w2mu)
    W2 = W2.at[h:, lv_off:lv_off + y_dim].set(w2lv)
    W2 = W2.astype(mxu_dtype)                                         # [2h, 2*lv_off]
    b2 = jnp.zeros((1, 2 * lv_off), jnp.float32)
    b2 = b2.at[:, :y_dim].set(b1mu[:, :0].reshape(1, 0) if False else b2mu)
    b2 = b2.at[:, lv_off:lv_off + y_dim].set(b2lv)                    # [1, 2*lv_off]

    # ---- tile N: big tiles, multiple of 8, grid G >= 2 and even (v7x 2 TCs) ----
    row_tile = max(8, _round_up(row_tile, 8))
    n8 = _round_up(N, 8)
    g = max(2, _cdiv(N, row_tile))
    if g % 2 == 1:
        g += 1
    TN = min(max(8, _round_up(_cdiv(N, g), 8)), n8)
    G = _cdiv(N, TN)

    # ---- stream x in the MXU dtype (halves its DMA bytes); y/y_perm stay f32 ----
    x_in = x if x.dtype == mxu_dtype else x.astype(mxu_dtype)
    y_in = y if y.dtype == jnp.float32 else y.astype(jnp.float32)
    yperm_in = y_perm if y_perm.dtype == jnp.float32 else y_perm.astype(jnp.float32)

    x_bytes = jnp.dtype(mxu_dtype).itemsize
    w_bytes = jnp.dtype(mxu_dtype).itemsize

    # ---- explicit VMEM budget (v7x has only 64 MiB physical VMEM) ----
    vmem_in = 2 * (TN * x_dim * x_bytes + 2 * TN * y_dim * 4)          # dbl-buffered
    vmem_w = (x_dim * 2 * h + 2 * h * 2 * lv_off) * w_bytes + (2 * h + 2 * lv_off) * 4
    vmem_mid = TN * (2 * h + 2 * lv_off + 2 * y_dim) * 4               # h1, z2, contrib
    vmem_out = 2 * 128 * 4
    vmem_limit = int(min(max(2 * (vmem_in + vmem_w + vmem_mid + vmem_out) + (4 << 20),
                             16 << 20), 64 << 20))

    cost = pl.CostEstimate(
        flops=2 * N * (x_dim * 2 * h + 2 * h * 2 * lv_off) + 10 * N * y_dim,
        transcendentals=2 * N * y_dim,
        bytes_accessed=(N * x_dim * x_bytes + 2 * N * y_dim * 4
                        + (x_dim * 2 * h + 2 * h * 2 * lv_off) * w_bytes
                        + (2 * h + 2 * lv_off) * 4 + G * 128 * 4),
    )

    partials = pl.pallas_call(
        functools.partial(_club_block_kernel, y_dim=y_dim, lv_off=lv_off,
                          n_rows=N, row_tile=TN),
        out_shape=jax.ShapeDtypeStruct((G, 1, 128), jnp.float32),
        grid=(G,),
        in_specs=[
            pl.BlockSpec((TN, x_dim), lambda i: (i, 0)),               # x tile
            pl.BlockSpec((TN, y_dim), lambda i: (i, 0)),               # y tile
            pl.BlockSpec((TN, y_dim), lambda i: (i, 0)),               # y_perm tile
            pl.BlockSpec((x_dim, 2 * h), lambda i: (0, 0)),            # W1 (resident)
            pl.BlockSpec((1, 2 * h), lambda i: (0, 0)),                # b1 (resident)
            pl.BlockSpec((2 * h, 2 * lv_off), lambda i: (0, 0)),       # W2 (resident)
            pl.BlockSpec((1, 2 * lv_off), lambda i: (0, 0)),           # b2 (resident)
        ],
        out_specs=pl.BlockSpec((1, 1, 128), lambda i: (i, 0, 0)),
        compiler_params=pltpu.CompilerParams(
            dimension_semantics=("parallel",),
            vmem_limit_bytes=vmem_limit),
        cost_estimate=cost,
    )(x_in, y_in, yperm_in, W1, b1, W2, b2)

    # per-block partial sums -> batch mean with the TRUE N, then /2.
    return jnp.sum(partials[:, 0, 0]) / (2.0 * N)


def init_params(key, x_dim, y_dim, hidden_size, dtype=jnp.float32):
    h = hidden_size // 2
    ks = jax.random.split(key, 8)

    def lin(kw, kb, fan_in, fan_out):
        bound = 1.0 / jnp.sqrt(fan_in)
        w = jax.random.uniform(kw, (fan_in, fan_out), dtype, -bound, bound)
        b = jax.random.uniform(kb, (1, fan_out), dtype, -bound, bound)
        return w, b

    w1mu, b1mu = lin(ks[0], ks[1], x_dim, h)
    w2mu, b2mu = lin(ks[2], ks[3], h, y_dim)
    w1lv, b1lv = lin(ks[4], ks[5], x_dim, h)
    w2lv, b2lv = lin(ks[6], ks[7], h, y_dim)
    return (w1mu, b1mu, w2mu, b2mu, w1lv, b1lv, w2lv, b2lv)


def reference_forward(x, y, y_perm, params):
    (w1mu, b1mu, w2mu, b2mu, w1lv, b1lv, w2lv, b2lv) = params
    mu = jnp.maximum(x @ w1mu + b1mu, 0.0) @ w2mu + b2mu
    logvar = jnp.tanh(jnp.maximum(x @ w1lv + b1lv, 0.0) @ w2lv + b2lv)
    pos = -(mu - y) ** 2 / jnp.exp(logvar)
    neg = -(mu - y_perm) ** 2 / jnp.exp(logvar)
    return jnp.mean(pos.sum(-1) - neg.sum(-1)) / 2.0


if __name__ == "__main__":
    # Small but grid-exercising sizes: N=300 is not a multiple of the row tile,
    # so the in-kernel tail masking and the even-G split (G=2) are exercised.
    N, x_dim, y_dim, hidden_size = 300, 32, 16, 64

    key = jax.random.PRNGKey(0)
    k_params, k_x, k_y, k_perm = jax.random.split(key, 4)

    params = init_params(k_params, x_dim, y_dim, hidden_size)
    x = jax.random.normal(k_x, (N, x_dim), jnp.float32)
    y = jax.random.normal(k_y, (N, y_dim), jnp.float32)

    # torch.randperm equivalent (deterministic here via fixed key)
    perm = jax.random.permutation(k_perm, N)
    y_perm = y[perm]

    ref = reference_forward(x, y, y_perm, params)

    # f32 MXU path: tight numerical check (lane-padded z2 layout).
    out_f32 = club_sample_forward(x, y, y_perm, params,
                                  row_tile=512, mxu_dtype=jnp.float32)
    out_f32 = jax.block_until_ready(out_f32)
    assert jnp.allclose(out_f32, ref, rtol=1e-4, atol=1e-4), (out_f32, ref)

    # bf16 MXU path (v6e/v7x-friendly): looser check.
    out_bf16 = club_sample_forward(x, y, y_perm, params,
                                   row_tile=512, mxu_dtype=jnp.bfloat16)
    out_bf16 = jax.block_until_ready(out_bf16)
    assert jnp.allclose(out_bf16, ref, rtol=5e-2, atol=5e-2), (out_bf16, ref)

    # v5e-style path: no lane padding of the logvar branch (128-wide MXU, 1 push).
    out_v5e = club_sample_forward(x, y, y_perm, params,
                                  row_tile=512, mxu_dtype=jnp.float32,
                                  pad_logvar_lanes=False)
    out_v5e = jax.block_until_ready(out_v5e)
    assert jnp.allclose(out_v5e, ref, rtol=1e-4, atol=1e-4), (out_v5e, ref)

    print("KERNEL_OK")
</pallas_src>

<mosaic_0001>
module attributes {stable_mosaic.version = 11 : i64} {
  func.func @_club_block_kernel(%arg0: i32, %arg1: memref<152x32xf32, #tpu.memory_space<vmem>>, %arg2: memref<152x16xf32, #tpu.memory_space<vmem>>, %arg3: memref<152x16xf32, #tpu.memory_space<vmem>>, %arg4: memref<32x64xf32, #tpu.memory_space<vmem>>, %arg5: memref<1x64xf32, #tpu.memory_space<vmem>>, %arg6: memref<64x256xf32, #tpu.memory_space<vmem>>, %arg7: memref<1x256xf32, #tpu.memory_space<vmem>>, %arg8: memref<1x1x128xf32, #tpu.memory_space<vmem>>) attributes {dimension_semantics = [#tpu.dimension_semantics<parallel>], iteration_bounds = array<i64: 2>, scalar_prefetch = 0 : i64, scratch_operands = 0 : i64, tpu.core_type = #tpu.core_type<tc>, window_params = [{transform_indices = @transform_0, window_bounds = array<i64: 152, 32>}, {transform_indices = @transform_1, window_bounds = array<i64: 152, 16>}, {transform_indices = @transform_2, window_bounds = array<i64: 152, 16>}, {pipeline_mode = #tpu.pipeline_mode<synchronous>, transform_indices = @transform_3, window_bounds = array<i64: 32, 64>}, {pipeline_mode = #tpu.pipeline_mode<synchronous>, transform_indices = @transform_4, window_bounds = array<i64: 1, 64>}, {pipeline_mode = #tpu.pipeline_mode<synchronous>, transform_indices = @transform_5, window_bounds = array<i64: 64, 256>}, {pipeline_mode = #tpu.pipeline_mode<synchronous>, transform_indices = @transform_6, window_bounds = array<i64: 1, 256>}, {transform_indices = @transform_7, window_bounds = array<i64: 1, 1, 128>}]} {
    %c0 = arith.constant 0 : index
    %c0_0 = arith.constant 0 : index
    %0 = vector.load %arg1[%c0, %c0_0] : memref<152x32xf32, #tpu.memory_space<vmem>>, vector<152x32xf32>
    %c0_1 = arith.constant 0 : index
    %c0_2 = arith.constant 0 : index
    %1 = vector.load %arg4[%c0_1, %c0_2] : memref<32x64xf32, #tpu.memory_space<vmem>>, vector<32x64xf32>
    %cst = arith.constant dense<0.000000e+00> : vector<152x64xf32>
    %2 = tpu.matmul %0, %1, %cst {dimension_numbers = #tpu.dot_dimension_numbers<[1], [0], [0], [1], [0, 0, 1, 1], [], []>} : vector<152x32xf32>, vector<32x64xf32>, vector<152x64xf32> -> vector<152x64xf32>
    %c0_3 = arith.constant 0 : index
    %c0_4 = arith.constant 0 : index
    %3 = vector.load %arg5[%c0_3, %c0_4] : memref<1x64xf32, #tpu.memory_space<vmem>>, vector<1x64xf32>
    %4 = vector.broadcast %3 : vector<1x64xf32> to vector<152x64xf32>
    %5 = arith.addf %2, %4 : vector<152x64xf32>
    %cst_5 = arith.constant 0.000000e+00 : f32
    %6 = vector.broadcast %cst_5 : f32 to vector<152x64xf32>
    %7 = arith.maximumf %5, %6 : vector<152x64xf32>
    %c0_6 = arith.constant 0 : index
    %c0_7 = arith.constant 0 : index
    %8 = vector.load %arg6[%c0_6, %c0_7] : memref<64x256xf32, #tpu.memory_space<vmem>>, vector<64x256xf32>
    %cst_8 = arith.constant dense<0.000000e+00> : vector<152x256xf32>
    %9 = tpu.matmul %7, %8, %cst_8 {dimension_numbers = #tpu.dot_dimension_numbers<[1], [0], [0], [1], [0, 0, 1, 1], [], []>} : vector<152x64xf32>, vector<64x256xf32>, vector<152x256xf32> -> vector<152x256xf32>
    %c0_9 = arith.constant 0 : index
    %c0_10 = arith.constant 0 : index
    %10 = vector.load %arg7[%c0_9, %c0_10] : memref<1x256xf32, #tpu.memory_space<vmem>>, vector<1x256xf32>
    %11 = vector.broadcast %10 : vector<1x256xf32> to vector<152x256xf32>
    %12 = arith.addf %9, %11 : vector<152x256xf32>
    %13 = vector.extract_strided_slice %12 {offsets = [0, 0], sizes = [152, 16], strides = [1, 1]} : vector<152x256xf32> to vector<152x16xf32>
    %14 = vector.extract_strided_slice %12 {offsets = [0, 128], sizes = [152, 16], strides = [1, 1]} : vector<152x256xf32> to vector<152x16xf32>
    %15 = math.tanh %14 : vector<152x16xf32>
    %cst_11 = arith.constant 0.000000e+00 : f32
    %16 = vector.broadcast %cst_11 : f32 to vector<152x16xf32>
    %17 = arith.subf %16, %15 : vector<152x16xf32>
    %18 = math.exp %17 : vector<152x16xf32>
    %c0_12 = arith.constant 0 : index
    %c0_13 = arith.constant 0 : index
    %19 = vector.load %arg2[%c0_12, %c0_13] : memref<152x16xf32, #tpu.memory_space<vmem>>, vector<152x16xf32>
    %c0_14 = arith.constant 0 : index
    %c0_15 = arith.constant 0 : index
    %20 = vector.load %arg3[%c0_14, %c0_15] : memref<152x16xf32, #tpu.memory_space<vmem>>, vector<152x16xf32>
    %21 = arith.subf %19, %20 : vector<152x16xf32>
    %cst_16 = arith.constant 2.000000e+00 : f32
    %22 = vector.broadcast %cst_16 : f32 to vector<152x16xf32>
    %23 = arith.mulf %22, %13 : vector<152x16xf32>
    %24 = arith.subf %23, %19 : vector<152x16xf32>
    %25 = arith.subf %24, %20 : vector<152x16xf32>
    %26 = arith.mulf %21, %25 : vector<152x16xf32>
    %27 = arith.mulf %26, %18 : vector<152x16xf32>
    %c152_i32 = arith.constant 152 : i32
    %28 = arith.muli %arg0, %c152_i32 : i32
    %29 = tpu.iota {dimensions = array<i32: 0>} : vector<152x1xi32>
    %30 = vector.broadcast %28 : i32 to vector<152x1xi32>
    %31 = arith.addi %30, %29 : vector<152x1xi32>
    %c300_i32 = arith.constant 300 : i32
    %32 = vector.broadcast %c300_i32 : i32 to vector<152x1xi32>
    %33 = arith.cmpi slt, %31, %32 : vector<152x1xi32>
    %cst_17 = arith.constant 0.000000e+00 : f32
    %34 = vector.shape_cast %33 : vector<152x1xi1> to vector<152x1xi1>
    %35 = vector.broadcast %34 : vector<152x1xi1> to vector<152x16xi1>
    %36 = vector.broadcast %cst_17 : f32 to vector<152x16xf32>
    %37 = arith.select %35, %27, %36 : vector<152x16xi1>, vector<152x16xf32>
    %38 = vector.shape_cast %37 : vector<152x16xf32> to vector<1x152x16xf32>
    %cst_18 = arith.constant dense<0.000000e+00> : vector<1xf32>
    %39 = vector.multi_reduction <add>, %38, %cst_18 [1, 2] : vector<1x152x16xf32> to vector<1xf32>
    %40 = vector.shape_cast %39 : vector<1xf32> to vector<1x1x1xf32>
    %41 = vector.extract %40[0, 0, 0] : f32 from vector<1x1x1xf32>
    %42 = vector.broadcast %41 : f32 to vector<1x1x128xf32>
    %c0_19 = arith.constant 0 : index
    %c0_20 = arith.constant 0 : index
    %c0_21 = arith.constant 0 : index
    %43 = vector.load %arg8[%c0_19, %c0_20, %c0_21] : memref<1x1x128xf32, #tpu.memory_space<vmem>>, vector<1x1x128xf32>
    tpu.vector_store %arg8[%c0_19, %c0_20, %c0_21], %42 {strides = array<i32>} : memref<1x1x128xf32, #tpu.memory_space<vmem>>, vector<1x1x128xf32>,
    return
  }
  func.func @transform_0(%arg0: i32) -> (i32, i32) {
    %c0_i32 = arith.constant 0 : i32
    %c0_i32_0 = arith.constant 0 : i32
    return %arg0, %c0_i32 : i32, i32
  }
  func.func @transform_1(%arg0: i32) -> (i32, i32) {
    %c0_i32 = arith.constant 0 : i32
    %c0_i32_0 = arith.constant 0 : i32
    return %arg0, %c0_i32 : i32, i32
  }
  func.func @transform_2(%arg0: i32) -> (i32, i32) {
    %c0_i32 = arith.constant 0 : i32
    %c0_i32_0 = arith.constant 0 : i32
    return %arg0, %c0_i32 : i32, i32
  }
  func.func @transform_3(%arg0: i32) -> (i32, i32) {
    %c0_i32 = arith.constant 0 : i32
    %c0_i32_0 = arith.constant 0 : i32
    %c0_i32_1 = arith.constant 0 : i32
    return %c0_i32, %c0_i32_0 : i32, i32
  }
  func.func @transform_4(%arg0: i32) -> (i32, i32) {
    %c0_i32 = arith.constant 0 : i32
    %c0_i32_0 = arith.constant 0 : i32
    %c0_i32_1 = arith.constant 0 : i32
    return %c0_i32, %c0_i32_0 : i32, i32
  }
  func.func @transform_5(%arg0: i32) -> (i32, i32) {
    %c0_i32 = arith.constant 0 : i32
    %c0_i32_0 = arith.constant 0 : i32
    %c0_i32_1 = arith.constant 0 : i32
    return %c0_i32, %c0_i32_0 : i32, i32
  }
  func.func @transform_6(%arg0: i32) -> (i32, i32) {
    %c0_i32 = arith.constant 0 : i32
    %c0_i32_0 = arith.constant 0 : i32
    %c0_i32_1 = arith.constant 0 : i32
    return %c0_i32, %c0_i32_0 : i32, i32
  }
  func.func @transform_7(%arg0: i32) -> (i32, i32, i32) {
    %c0_i32 = arith.constant 0 : i32
    %c0_i32_0 = arith.constant 0 : i32
    %c0_i32_1 = arith.constant 0 : i32
    return %arg0, %c0_i32, %c0_i32_0 : i32, i32, i32
  }
}

</mosaic_0001>

<llo_original>
// kernel: tpu_custom_call.1
$region0: #{tpu_custom_call.1}
  #allocation0 [shape = 'u32[]', space=smem, size = 0x4, offset = 0x4, fixed_abs, tag = 'smem constant byte address 0x4 - core index']
  #allocation1 [shape = 'u32[144,128]{1,0:T(1,128)}', space=vmem, size = 0x12000, scoped, tag = 'internal scratch']
  %s0 = inlined_call_operand.vmem [shape: f32[300,32], index: 0, kind: input, shape index: {}]
  %s1 = inlined_call_operand.vmem [shape: f32[300,16], index: 1, kind: input, shape index: {}]
  %s2 = inlined_call_operand.vmem [shape: f32[300,16], index: 2, kind: input, shape index: {}]
  %s3 = inlined_call_operand.vmem [shape: f32[32,64], index: 3, kind: input, shape index: {}]
  %s4 = inlined_call_operand.vmem [shape: f32[1,64], index: 4, kind: input, shape index: {}]
  %s5 = inlined_call_operand.vmem [shape: f32[64,256], index: 5, kind: input, shape index: {}]
  %s6 = inlined_call_operand.vmem [shape: f32[1,256], index: 6, kind: input, shape index: {}]
  %s7 = inlined_call_operand.hbm [shape: f32[2,1,128], index: 7, kind: output, shape index: {}]
  %s8 = sld [smem:[#allocation0]]
  $region61: #{tpu_custom_call.1} parent=0
    _
  %s10 = ssub.s32 1, %s8
  %s11 = scalar_select 0, %s10, %s8
  $region1: #{tpu_custom_call.1} parent=0
    #allocation2 [shape = 'u8[1024]{0}', space=vmem, size = 0x400, scoped, tag = 'output window, operand 0']
    #allocation3 [shape = 's32[2]{0}', space=sflag, size = 0x8, scoped, tag = 'scoped memory for tpu_custom_call.1']
    %12 = vsyncpa [#allocation3], 0
    %s13 = scalar_lea.sflag [#allocation3], 1
    %14 = vsyncpa %s13, 0
    loop: start=0, step=1, limit=4
    $region2: #{tpu_custom_call.1} parent=1 // loop_pre_header
      _
    $region3: #{tpu_custom_call.1} parent=1 // loop_header
      %s16 = sphi 0, %s20
      %p17 = scmp.ge.s32.totalorder %s16, 4
      %s26 = sphi 0, %s28
      %s29 = sphi 0, %s26
      %s30 = sphi 0, %s29
      %s46 = sphi 0, %s30
      %s52 = sphi 0, %s54
      %s55 = sphi 0, %s52
      %s56 = sphi 0, %s55
      %s72 = sphi 0, %s56
      %s78 = sphi 0, %s80
      %s81 = sphi 0, %s78
      %s82 = sphi 0, %s81
      %s98 = sphi 0, %s82
      %s102 = sphi 0, %s102
      %s104 = sphi 0, %s102
      %s105 = sphi 0, %s104
      %s119 = sphi 0, %s105
      %s123 = sphi 0, %s123
      %s125 = sphi 0, %s123
      %s126 = sphi 0, %s125
      %s140 = sphi 0, %s126
      %s144 = sphi 0, %s144
      %s146 = sphi 0, %s144
      %s147 = sphi 0, %s146
      %s161 = sphi 0, %s147
      %s165 = sphi 0, %s165
      %s167 = sphi 0, %s165
      %s168 = sphi 0, %s167
      %s182 = sphi 0, %s168
      %s188 = sphi 0, %s190
      %s191 = sphi 0, %s188
      %s192 = sphi 0, %s191
      %s208 = sphi 0, %s192
    $region4: #{tpu_custom_call.1} parent=1 // loop_header_branch
      %19 = sbr.rel (%p17) target = $region8
    $region5: #{tpu_custom_call.1} parent=1 // loop_body
      %s21 = ssub.s32 %s16, 1
      %s22 = ssub.s32 %s16, 2
      %s23 = sadd.s32 %s16, 1
      %s24 = ssub.s32 %s16, %s23
      %p25 = scmp.eq.s32.totalorder %s24, 0
      %s27 = sadd.s32 %s26, 1
      %s28 = scalar_select %p25, %s26, %s27
      %p31 = pneg %p25
      %p32 = scmp.eq.s32.totalorder %s16, 1
      %p33 = por %p31, %p32
      %p34 = scmp.ne.s32.totalorder %s26, %s29
      %p35 = scmp.eq.s32.totalorder %s16, 0
      %p36 = por %p34, %p35
      %p37 = scmp.ne.s32.totalorder %s26, %s29
      %p38 = scmp.eq.s32.totalorder %s21, 1
      %p39 = por %p37, %p38
      %p40 = scmp.ne.s32.totalorder %s29, %s30
      %p41 = scmp.eq.s32.totalorder %s21, 0
      %p42 = por %p40, %p41
      %p43 = scmp.ne.s32.totalorder %s29, %s30
      %p44 = scmp.eq.s32.totalorder %s22, 1
      %p45 = por %p43, %p44
      %p47 = scmp.ne.s32.totalorder %s30, %s46
      %p48 = scmp.eq.s32.totalorder %s22, 0
      %p49 = por %p47, %p48
      %s50 = ssub.s32 %s16, %s23
      %p51 = scmp.eq.s32.totalorder %s50, 0
      %s53 = sadd.s32 %s52, 1
      %s54 = scalar_select %p51, %s52, %s53
      %p57 = pneg %p51
      %p58 = scmp.eq.s32.totalorder %s16, 1
      %p59 = por %p57, %p58
      %p60 = scmp.ne.s32.totalorder %s52, %s55
      %p61 = scmp.eq.s32.totalorder %s16, 0
      %p62 = por %p60, %p61
      %p63 = scmp.ne.s32.totalorder %s52, %s55
      %p64 = scmp.eq.s32.totalorder %s21, 1
      %p65 = por %p63, %p64
      %p66 = scmp.ne.s32.totalorder %s55, %s56
      %p67 = scmp.eq.s32.totalorder %s21, 0
      %p68 = por %p66, %p67
      %p69 = scmp.ne.s32.totalorder %s55, %s56
      %p70 = scmp.eq.s32.totalorder %s22, 1
      %p71 = por %p69, %p70
      %p73 = scmp.ne.s32.totalorder %s56, %s72
      %p74 = scmp.eq.s32.totalorder %s22, 0
      %p75 = por %p73, %p74
      %s76 = ssub.s32 %s16, %s23
      %p77 = scmp.eq.s32.totalorder %s76, 0
      %s79 = sadd.s32 %s78, 1
      %s80 = scalar_select %p77, %s78, %s79
      %p83 = pneg %p77
      %p84 = scmp.eq.s32.totalorder %s16, 1
      %p85 = por %p83, %p84
      %p86 = scmp.ne.s32.totalorder %s78, %s81
      %p87 = scmp.eq.s32.totalorder %s16, 0
      %p88 = por %p86, %p87
      %p89 = scmp.ne.s32.totalorder %s78, %s81
      %p90 = scmp.eq.s32.totalorder %s21, 1
      %p91 = por %p89, %p90
      %p92 = scmp.ne.s32.totalorder %s81, %s82
      %p93 = scmp.eq.s32.totalorder %s21, 0
      %p94 = por %p92, %p93
      %p95 = scmp.ne.s32.totalorder %s81, %s82
      %p96 = scmp.eq.s32.totalorder %s22, 1
      %p97 = por %p95, %p96
      %p99 = scmp.ne.s32.totalorder %s82, %s98
      %p100 = scmp.eq.s32.totalorder %s22, 0
      %p101 = por %p99, %p100
      %s103 = sadd.s32 %s102, 1
      %p106 = scmp.eq.s32.totalorder %s16, 1
      %p107 = scmp.ne.s32.totalorder %s102, %s104
      %p108 = scmp.eq.s32.totalorder %s16, 0
      %p109 = por %p107, %p108
      %p110 = scmp.ne.s32.totalorder %s102, %s104
      %p111 = scmp.eq.s32.totalorder %s21, 1
      %p112 = por %p110, %p111
      %p113 = scmp.ne.s32.totalorder %s104, %s105
      %p114 = scmp.eq.s32.totalorder %s21, 0
      %p115 = por %p113, %p114
      %p116 = scmp.ne.s32.totalorder %s104, %s105
      %p117 = scmp.eq.s32.totalorder %s22, 1
      %p118 = por %p116, %p117
      %p120 = scmp.ne.s32.totalorder %s105, %s119
      %p121 = scmp.eq.s32.totalorder %s22, 0
      %p122 = por %p120, %p121
      %s124 = sadd.s32 %s123, 1
      %p127 = scmp.eq.s32.totalorder %s16, 1
      %p128 = scmp.ne.s32.totalorder %s123, %s125
      %p129 = scmp.eq.s32.totalorder %s16, 0
      %p130 = por %p128, %p129
      %p131 = scmp.ne.s32.totalorder %s123, %s125
      %p132 = scmp.eq.s32.totalorder %s21, 1
      %p133 = por %p131, %p132
      %p134 = scmp.ne.s32.totalorder %s125, %s126
      %p135 = scmp.eq.s32.totalorder %s21, 0
      %p136 = por %p134, %p135
      %p137 = scmp.ne.s32.totalorder %s125, %s126
      %p138 = scmp.eq.s32.totalorder %s22, 1
      %p139 = por %p137, %p138
      %p141 = scmp.ne.s32.totalorder %s126, %s140
      %p142 = scmp.eq.s32.totalorder %s22, 0
      %p143 = por %p141, %p142
      %s145 = sadd.s32 %s144, 1
      %p148 = scmp.eq.s32.totalorder %s16, 1
      %p149 = scmp.ne.s32.totalorder %s144, %s146
      %p150 = scmp.eq.s32.totalorder %s16, 0
      %p151 = por %p149, %p150
      %p152 = scmp.ne.s32.totalorder %s144, %s146
      %p153 = scmp.eq.s32.totalorder %s21, 1
      %p154 = por %p152, %p153
      %p155 = scmp.ne.s32.totalorder %s146, %s147
      %p156 = scmp.eq.s32.totalorder %s21, 0
      %p157 = por %p155, %p156
      %p158 = scmp.ne.s32.totalorder %s146, %s147
      %p159 = scmp.eq.s32.totalorder %s22, 1
      %p160 = por %p158, %p159
      %p162 = scmp.ne.s32.totalorder %s147, %s161
      %p163 = scmp.eq.s32.totalorder %s22, 0
      %p164 = por %p162, %p163
      %s166 = sadd.s32 %s165, 1
      %p169 = scmp.eq.s32.totalorder %s16, 1
      %p170 = scmp.ne.s32.totalorder %s165, %s167
      %p171 = scmp.eq.s32.totalorder %s16, 0
      %p172 = por %p170, %p171
      %p173 = scmp.ne.s32.totalorder %s165, %s167
      %p174 = scmp.eq.s32.totalorder %s21, 1
      %p175 = por %p173, %p174
      %p176 = scmp.ne.s32.totalorder %s167, %s168
      %p177 = scmp.eq.s32.totalorder %s21, 0
      %p178 = por %p176, %p177
      %p179 = scmp.ne.s32.totalorder %s167, %s168
      %p180 = scmp.eq.s32.totalorder %s22, 1
      %p181 = por %p179, %p180
      %p183 = scmp.ne.s32.totalorder %s168, %s182
      %p184 = scmp.eq.s32.totalorder %s22, 0
      %p185 = por %p183, %p184
      %s186 = ssub.s32 %s16, %s23
      %p187 = scmp.eq.s32.totalorder %s186, 0
      %s189 = sadd.s32 %s188, 1
      %s190 = scalar_select %p187, %s188, %s189
      %p193 = pneg %p187
      %p194 = scmp.eq.s32.totalorder %s16, 1
      %p195 = por %p193, %p194
      %p196 = scmp.ne.s32.totalorder %s188, %s191
      %p197 = scmp.eq.s32.totalorder %s16, 0
      %p198 = por %p196, %p197
      %p199 = scmp.ne.s32.totalorder %s188, %s191
      %p200 = scmp.eq.s32.totalorder %s21, 1
      %p201 = por %p199, %p200
      %p202 = scmp.ne.s32.totalorder %s191, %s192
      %p203 = scmp.eq.s32.totalorder %s21, 0
      %p204 = por %p202, %p203
      %p205 = scmp.ne.s32.totalorder %s191, %s192
      %p206 = scmp.eq.s32.totalorder %s22, 1
      %p207 = por %p205, %p206
      %p209 = scmp.ne.s32.totalorder %s192, %s208
      %p210 = scmp.eq.s32.totalorder %s22, 0
      %p211 = por %p209, %p210
      %p212 = scmp.le.s32.totalorder 1, %s16
      %p213 = scmp.lt.s32.totalorder %s16, 3
      %p214 = pnand %p212, %p213
      %p215 = pneg %p214
      // Predicated region
      $region9: #{tpu_custom_call.1} parent=5 // pred_check
        _
      $region10: #{tpu_custom_call.1} parent=5 // pred_check_branch
        %217 = sbr.rel (%p214) target = $region12
      $region11: #{tpu_custom_call.1} parent=5 // pred_region
        %s218 = ssub.s32 %s16, 1
        // Predicated region
        $region13: #{tpu_custom_call.1} parent=11 // pred_check
          %p219 = pneg %p115
        $region14: #{tpu_custom_call.1} parent=11 // pred_check_branch
          %221 = sbr.rel (%p219) target = $region16
        $region15: #{tpu_custom_call.1} parent=11 // pred_region
          _
        $region16: #{tpu_custom_call.1} parent=11 // pred_fallthru
          _
        // Predicated region
        $region17: #{tpu_custom_call.1} parent=11 // pred_check
          %p222 = pneg %p136
        $region18: #{tpu_custom_call.1} parent=11 // pred_check_branch
          %224 = sbr.rel (%p222) target = $region20
        $region19: #{tpu_custom_call.1} parent=11 // pred_region
          _
        $region20: #{tpu_custom_call.1} parent=11 // pred_fallthru
          _
        // Predicated region
        $region21: #{tpu_custom_call.1} parent=11 // pred_check
          %p225 = pneg %p157
        $region22: #{tpu_custom_call.1} parent=11 // pred_check_branch
          %227 = sbr.rel (%p225) target = $region24
        $region23: #{tpu_custom_call.1} parent=11 // pred_region
          _
        $region24: #{tpu_custom_call.1} parent=11 // pred_fallthru
          _
        // Predicated region
        $region25: #{tpu_custom_call.1} parent=11 // pred_check
          %p228 = pneg %p178
        $region26: #{tpu_custom_call.1} parent=11 // pred_check_branch
          %230 = sbr.rel (%p228) target = $region28
        $region27: #{tpu_custom_call.1} parent=11 // pred_region
          _
        $region28: #{tpu_custom_call.1} parent=11 // pred_fallthru
          _
      $region12: #{tpu_custom_call.1} parent=5 // pred_fallthru
        _
      %p231 = scmp.lt.s32.totalorder %s16, 2
      // Predicated region
      $region29: #{tpu_custom_call.1} parent=5 // pred_check
        %p232 = pneg %p231
      $region30: #{tpu_custom_call.1} parent=5 // pred_check_branch
        %234 = sbr.rel (%p232) target = $region32
      $region31: #{tpu_custom_call.1} parent=5 // pred_region
        // Predicated region
        $region33: #{tpu_custom_call.1} parent=31 // pred_check
          %p235 = pneg %p36
        $region34: #{tpu_custom_call.1} parent=31 // pred_check_branch
          %237 = sbr.rel (%p235) target = $region36
        $region35: #{tpu_custom_call.1} parent=31 // pred_region
          %s238 = smul.u32 19, %s16
          %p239 = scmp.lt.s32.totalorder %s238, 37
          %s240 = scalar_select %p239, %s238, 37
          %s241 = smul.addr %s240, 8
          %s242 = scalar_lea.vmem %s0, %s241
          %s243 = smul.u32 19, %s16
        $region36: #{tpu_custom_call.1} parent=31 // pred_fallthru
          _
        // Predicated region
        $region37: #{tpu_custom_call.1} parent=31 // pred_check
          %p244 = pneg %p62
        $region38: #{tpu_custom_call.1} parent=31 // pred_check_branch
          %246 = sbr.rel (%p244) target = $region40
        $region39: #{tpu_custom_call.1} parent=31 // pred_region
          %s247 = smul.u32 19, %s16
          %p248 = scmp.lt.s32.totalorder %s247, 37
          %s249 = scalar_select %p248, %s247, 37
          %s250 = smul.addr %s249, 8
          %s251 = scalar_lea.vmem %s1, %s250
          %s252 = smul.u32 19, %s16
        $region40: #{tpu_custom_call.1} parent=31 // pred_fallthru
          _
        // Predicated region
        $region41: #{tpu_custom_call.1} parent=31 // pred_check
          %p253 = pneg %p88
        $region42: #{tpu_custom_call.1} parent=31 // pred_check_branch
          %255 = sbr.rel (%p253) target = $region44
        $region43: #{tpu_custom_call.1} parent=31 // pred_region
          %s256 = smul.u32 19, %s16
          %p257 = scmp.lt.s32.totalorder %s256, 37
          %s258 = scalar_select %p257, %s256, 37
          %s259 = smul.addr %s258, 8
          %s260 = scalar_lea.vmem %s2, %s259
          %s261 = smul.u32 19, %s16
        $region44: #{tpu_custom_call.1} parent=31 // pred_fallthru
          _
      $region32: #{tpu_custom_call.1} parent=5 // pred_fallthru
        _
      %p262 = scmp.le.s32.totalorder 1, %s16
      %p263 = scmp.lt.s32.totalorder %s16, 3
      %p264 = pnand %p262, %p263
      %p265 = pneg %p264
      // Predicated region
      $region45: #{tpu_custom_call.1} parent=5 // pred_check
        _
      $region46: #{tpu_custom_call.1} parent=5 // pred_check_branch
        %267 = sbr.rel (%p264) target = $region48
      $region47: #{tpu_custom_call.1} parent=5 // pred_region
        %s268 = ssub.s32 %s16, 1
        %s269 = smul.u32 19, %s21
        %p270 = scmp.lt.s32.totalorder %s269, 37
        %s271 = scalar_select %p270, %s269, 37
        %s272 = smul.addr %s271, 8
        %s273 = scalar_lea.vmem %s0, %s272
        %p274 = pneg %p42
        %p275 = pneg %p39
        %s276 = smul.u32 19, %s21
        %p277 = scmp.lt.s32.totalorder %s276, 37
        %s278 = scalar_select %p277, %s276, 37
        %s279 = smul.addr %s278, 8
        %s280 = scalar_lea.vmem %s1, %s279
        %p281 = pneg %p68
        %p282 = pneg %p65
        %s283 = smul.u32 19, %s21
        %p284 = scmp.lt.s32.totalorder %s283, 37
        %s285 = scalar_select %p284, %s283, 37
        %s286 = smul.addr %s285, 8
        %s287 = scalar_lea.vmem %s2, %s286
        %p288 = pneg %p94
        %p289 = pneg %p91
        %p290 = pneg %p115
        %p291 = pneg %p112
        %p292 = pneg %p136
        %p293 = pneg %p133
        %p294 = pneg %p157
        %p295 = pneg %p154
        %p296 = pneg %p178
        %p297 = pneg %p175
        %p298 = pneg %p204
        %p299 = pneg %p201
        %s300 = sand.u32 %s191, 1
        %s301 = scalar_lea.sflag [#allocation3], %s300
        %s302 = sand.u32 %s191, 1
        %s303 = scalar_lea.vmem [#allocation2], %s302
        %s304 = smul.u32 19, %s21
        %p305 = scmp.lt.s32.totalorder %s304, 37
        %s306 = scalar_select %p305, %s304, 37
        %s307 = smul.addr %s306, 8
        %s308 = scalar_lea.vmem %s0, %s307
        %s309 = smul.u32 19, %s21
        %s310 = smul.u32 19, %s21
        %p311 = scmp.lt.s32.totalorder %s310, 37
        %s312 = scalar_select %p311, %s310, 37
        %s313 = smul.addr %s312, 8
        %s314 = scalar_lea.vmem %s1, %s313
        %s315 = smul.u32 19, %s21
        %s316 = smul.u32 19, %s21
        %p317 = scmp.lt.s32.totalorder %s316, 37
        %s318 = scalar_select %p317, %s316, 37
        %s319 = smul.addr %s318, 8
        %s320 = scalar_lea.vmem %s2, %s319
        %s321 = smul.u32 19, %s21
        %v322 = vld [vmem:[%s308] sm:$0xff]
        %v323 = vld [vmem:[%s308 + $0x8] sm:$0xff]
        %v324 = vld [vmem:[%s308 + $0x10] sm:$0xff]
        %v325 = vld [vmem:[%s308 + $0x18] sm:$0xff]
        %v326 = vld [vmem:[%s308 + $0x20] sm:$0xff]
        %v327 = vld [vmem:[%s308 + $0x28] sm:$0xff]
        %v328 = vld [vmem:[%s308 + $0x30] sm:$0xff]
        %v329 = vld [vmem:[%s308 + $0x38] sm:$0xff]
        %v330 = vld [vmem:[%s308 + $0x40] sm:$0xff]
        %v331 = vld [vmem:[%s308 + $0x48] sm:$0xff]
        %v332 = vld [vmem:[%s308 + $0x50] sm:$0xff]
        %v333 = vld [vmem:[%s308 + $0x58] sm:$0xff]
        %v334 = vld [vmem:[%s308 + $0x60] sm:$0xff]
        %v335 = vld [vmem:[%s308 + $0x68] sm:$0xff]
        %v336 = vld [vmem:[%s308 + $0x70] sm:$0xff]
        %v337 = vld [vmem:[%s308 + $0x78] sm:$0xff]
        %v338 = vld [vmem:[%s308 + $0x80] sm:$0xff]
        %v339 = vld [vmem:[%s308 + $0x88] sm:$0xff]
        %v340 = vld [vmem:[%s308 + $0x90] sm:$0xff]
        %v341 = vld [vmem:[%s3] sm:$0xff]
        %v342 = vld [vmem:[%s3 + $0x8] sm:$0xff]
        %v343 = vld [vmem:[%s3 + $0x10] sm:$0xff]
        %v344 = vld [vmem:[%s3 + $0x18] sm:$0xff]
        %v345 = vld [vmem:[%s4] sm:$0x1]
        %v347 = vlaneseq
        %v348 = vshrl.u32 %v347, 7
        %v349 = vsub.s32 0, %v348
        %v350 = vrot.slane %v345, %v349
        %vm352 = vcmask 261120
        %v354 = vsel %vm352, %v322, 0
        %v357 = vsel %vm352, %v323, 0
        %v360 = vsel %vm352, %v324, 0
        %v363 = vsel %vm352, %v325, 0
        %v366 = vsel %vm352, %v326, 0
        %v369 = vsel %vm352, %v327, 0
        %v372 = vsel %vm352, %v328, 0
        %v375 = vsel %vm352, %v329, 0
        %v378 = vsel %vm352, %v330, 0
        %v381 = vsel %vm352, %v331, 0
        %v384 = vsel %vm352, %v332, 0
        %v387 = vsel %vm352, %v333, 0
        %v390 = vsel %vm352, %v334, 0
        %v393 = vsel %vm352, %v335, 0
        %v396 = vsel %vm352, %v336, 0
        %v399 = vsel %vm352, %v337, 0
        %v402 = vsel %vm352, %v338, 0
        %v405 = vsel %vm352, %v339, 0
        %v408 = vsel %vm352, %v340, 0
        %410 = vmatprep.subr.mxu0 0.0
        %411 = vmatpush1.msra.mxu0 0.0
        %412 = vmatprep.subr.mxu0 0.0
        %413 = vmatpush1.msra.mxu0 0.0
        %414 = vmatprep.subr.mxu0 0.0
        %415 = vmatpush1.msra.mxu0 0.0
        %416 = vmatprep.subr.mxu0 0.0
        %417 = vmatpush1.msra.mxu0 0.0
        %418 = vmatprep.subr.mxu0 0.0
        %419 = vmatpush1.msra.mxu0 0.0
        %420 = vmatprep.subr.mxu0 0.0
        %421 = vmatpush1.msra.mxu0 0.0
        %422 = vmatprep.subr.mxu0 0.0
        %423 = vmatpush1.msra.mxu0 0.0
        %424 = vmatprep.subr.mxu0 0.0
        %425 = vmatpush1.msra.mxu0 0.0
        %426 = vmatprep.subr.mxu0 0.0
        %427 = vmatpush1.msra.mxu0 0.0
        %428 = vmatprep.subr.mxu0 0.0
        %429 = vmatpush1.msra.mxu0 0.0
        %430 = vmatprep.subr.mxu0 0.0
        %431 = vmatpush1.msra.mxu0 0.0
        %432 = vmatprep.subr.mxu0 0.0
        %433 = vmatpush1.msra.mxu0 0.0
        %434 = vmatprep.subr.mxu0 0.0
        %435 = vmatpush1.msra.mxu0 %v344
        %436 = vmatprep.subr.mxu0 0.0
        %437 = vmatpush1.msra.mxu0 %v343
        %438 = vmatprep.subr.mxu0 0.0
        %439 = vmatpush1.msra.mxu0 %v342
        %440 = vmatprep.subr.mxu0 0.0
        %441 = vmatpush1.msra.mxu0 %v341
        %442 = vmatprep.subr.mxu0 0.0
        %443 = vmatpush2.msra.mxu0 0.0
        %444 = vmatprep.subr.mxu0 0.0
        %445 = vmatpush2.msra.mxu0 0.0
        %446 = vmatprep.subr.mxu0 0.0
        %447 = vmatpush2.msra.mxu0 0.0
        %448 = vmatprep.subr.mxu0 0.0
        %449 = vmatpush2.msra.mxu0 0.0
        %450 = vmatprep.subr.mxu0 0.0
        %451 = vmatpush2.msra.mxu0 0.0
        %452 = vmatprep.subr.mxu0 0.0
        %453 = vmatpush2.msra.mxu0 0.0
        %454 = vmatprep.subr.mxu0 0.0
        %455 = vmatpush2.msra.mxu0 0.0
        %456 = vmatprep.subr.mxu0 0.0
        %457 = vmatpush2.msra.mxu0 0.0
        %458 = vmatprep.subr.mxu0 0.0
        %459 = vmatpush2.msra.mxu0 0.0
        %460 = vmatprep.subr.mxu0 0.0
        %461 = vmatpush2.msra.mxu0 0.0
        %462 = vmatprep.subr.mxu0 0.0
        %463 = vmatpush2.msra.mxu0 0.0
        %464 = vmatprep.subr.mxu0 0.0
        %465 = vmatpush2.msra.mxu0 0.0
        %466 = vmatprep.subr.mxu0 0.0
        %467 = vmatpush2.msra.mxu0 0.0
        %468 = vmatprep.subr.mxu0 0.0
        %469 = vmatpush2.msra.mxu0 0.0
        %470 = vmatprep.subr.mxu0 0.0
        %471 = vmatpush2.msra.mxu0 0.0
        %472 = vmatprep.subr.mxu0 0.0
        %473 = vmatpush2.msra.mxu0 0.0
        %474 = vmatprep.mubr.f32.mxu0 0.0
        %475 = vmatmul.mubr.f32.gmra.mxu0 %v354
        %v476 = vpop.f32.mrf.mxu0
        %v477 = vadd.f32 %v350, %v476
        %v478 = vpop.f32.mrf.mxu0
        %479 = vmatprep.mubr.f32.mxu0 0.0
        %480 = vmatmul.mubr.f32.gmra.mxu0 %v357
        %v481 = vpop.f32.mrf.mxu0
        %v482 = vadd.f32 %v350, %v481
        %v483 = vpop.f32.mrf.mxu0
        %484 = vmatprep.mubr.f32.mxu0 0.0
        %485 = vmatmul.mubr.f32.gmra.mxu0 %v360
        %v486 = vpop.f32.mrf.mxu0
        %v487 = vadd.f32 %v350, %v486
        %v488 = vpop.f32.mrf.mxu0
        %489 = vmatprep.mubr.f32.mxu0 0.0
        %490 = vmatmul.mubr.f32.gmra.mxu0 %v363
        %v491 = vpop.f32.mrf.mxu0
        %v492 = vadd.f32 %v350, %v491
        %v493 = vpop.f32.mrf.mxu0
        %494 = vmatprep.mubr.f32.mxu0 0.0
        %495 = vmatmul.mubr.f32.gmra.mxu0 %v366
        %v496 = vpop.f32.mrf.mxu0
        %v497 = vadd.f32 %v350, %v496
        %v498 = vpop.f32.mrf.mxu0
        %499 = vmatprep.mubr.f32.mxu0 0.0
        %500 = vmatmul.mubr.f32.gmra.mxu0 %v369
        %v501 = vpop.f32.mrf.mxu0
        %v502 = vadd.f32 %v350, %v501
        %v503 = vpop.f32.mrf.mxu0
        %504 = vmatprep.mubr.f32.mxu0 0.0
        %505 = vmatmul.mubr.f32.gmra.mxu0 %v372
        %v506 = vpop.f32.mrf.mxu0
        %v507 = vadd.f32 %v350, %v506
        %v508 = vpop.f32.mrf.mxu0
        %509 = vmatprep.mubr.f32.mxu0 0.0
        %510 = vmatmul.mubr.f32.gmra.mxu0 %v375
        %v511 = vpop.f32.mrf.mxu0
        %v512 = vadd.f32 %v350, %v511
        %v513 = vpop.f32.mrf.mxu0
        %514 = vmatprep.mubr.f32.mxu0 0.0
        %515 = vmatmul.mubr.f32.gmra.mxu0 %v378
        %v516 = vpop.f32.mrf.mxu0
        %v517 = vadd.f32 %v350, %v516
        %v518 = vpop.f32.mrf.mxu0
        %519 = vmatprep.mubr.f32.mxu0 0.0
        %520 = vmatmul.mubr.f32.gmra.mxu0 %v381
        %v521 = vpop.f32.mrf.mxu0
        %v522 = vadd.f32 %v350, %v521
        %v523 = vpop.f32.mrf.mxu0
        %524 = vmatprep.mubr.f32.mxu0 0.0
        %525 = vmatmul.mubr.f32.gmra.mxu0 %v384
        %v526 = vpop.f32.mrf.mxu0
        %v527 = vadd.f32 %v350, %v526
        %v528 = vpop.f32.mrf.mxu0
        %529 = vmatprep.mubr.f32.mxu0 0.0
        %530 = vmatmul.mubr.f32.gmra.mxu0 %v387
        %v531 = vpop.f32.mrf.mxu0
        %v532 = vadd.f32 %v350, %v531
        %v533 = vpop.f32.mrf.mxu0
        %534 = vmatprep.mubr.f32.mxu0 0.0
        %535 = vmatmul.mubr.f32.gmra.mxu0 %v390
        %v536 = vpop.f32.mrf.mxu0
        %v537 = vadd.f32 %v350, %v536
        %v538 = vpop.f32.mrf.mxu0
        %539 = vmatprep.mubr.f32.mxu0 0.0
        %540 = vmatmul.mubr.f32.gmra.mxu0 %v393
        %v541 = vpop.f32.mrf.mxu0
        %v542 = vadd.f32 %v350, %v541
        %v543 = vpop.f32.mrf.mxu0
        %544 = vmatprep.mubr.f32.mxu0 0.0
        %545 = vmatmul.mubr.f32.gmra.mxu0 %v396
        %v546 = vpop.f32.mrf.mxu0
        %v547 = vadd.f32 %v350, %v546
        %v548 = vpop.f32.mrf.mxu0
        %549 = vmatprep.mubr.f32.mxu0 0.0
        %550 = vmatmul.mubr.f32.gmra.mxu0 %v399
        %v551 = vpop.f32.mrf.mxu0
        %v552 = vadd.f32 %v350, %v551
        %v553 = vpop.f32.mrf.mxu0
        %554 = vmatprep.mubr.f32.mxu0 0.0
        %555 = vmatmul.mubr.f32.gmra.mxu0 %v402
        %v556 = vpop.f32.mrf.mxu0
        %v557 = vadd.f32 %v350, %v556
        %v558 = vpop.f32.mrf.mxu0
        %559 = vmatprep.mubr.f32.mxu0 0.0
        %560 = vmatmul.mubr.f32.gmra.mxu0 %v405
        %v561 = vpop.f32.mrf.mxu0
        %v562 = vadd.f32 %v350, %v561
        %v563 = vpop.f32.mrf.mxu0
        %564 = vmatprep.mubr.f32.mxu0 0.0
        %565 = vmatmul.mubr.f32.gmra.mxu0 %v408
        %v566 = vpop.f32.mrf.mxu0
        %v567 = vadd.f32 %v350, %v566
        %v568 = vpop.f32.mrf.mxu0
        %569 = vdwg.mxu0
        %v570 = vmax.f32 %v477, 0.0
        %v571 = vmax.f32 %v482, 0.0
        %v572 = vmax.f32 %v487, 0.0
        %v573 = vmax.f32 %v492, 0.0
        %v574 = vmax.f32 %v497, 0.0
        %v575 = vmax.f32 %v502, 0.0
        %v576 = vmax.f32 %v507, 0.0
        %v577 = vmax.f32 %v512, 0.0
        %v578 = vmax.f32 %v517, 0.0
        %v579 = vmax.f32 %v522, 0.0
        %v580 = vmax.f32 %v527, 0.0
        %v581 = vmax.f32 %v532, 0.0
        %v582 = vmax.f32 %v537, 0.0
        %v583 = vmax.f32 %v542, 0.0
        %v584 = vmax.f32 %v547, 0.0
        %v585 = vmax.f32 %v552, 0.0
        %v586 = vmax.f32 %v557, 0.0
        %v587 = vmax.f32 %v562, 0.0
        %v588 = vmax.f32 %v567, 0.0
        %v589 = vld [vmem:[%s5] sm:$0xff]
        %v590 = vld [vmem:[%s5 + $0x8] sm:$0xff]
        %v591 = vld [vmem:[%s5 + $0x10] sm:$0xff]
        %v592 = vld [vmem:[%s5 + $0x18] sm:$0xff]
        %v593 = vld [vmem:[%s5 + $0x20] sm:$0xff]
        %v594 = vld [vmem:[%s5 + $0x28] sm:$0xff]
        %v595 = vld [vmem:[%s5 + $0x30] sm:$0xff]
        %v596 = vld [vmem:[%s5 + $0x38] sm:$0xff]
        %v597 = vld [vmem:[%s5 + $0x40] sm:$0xff]
        %v598 = vld [vmem:[%s5 + $0x48] sm:$0xff]
        %v599 = vld [vmem:[%s5 + $0x50] sm:$0xff]
        %v600 = vld [vmem:[%s5 + $0x58] sm:$0xff]
        %v601 = vld [vmem:[%s5 + $0x60] sm:$0xff]
        %v602 = vld [vmem:[%s5 + $0x68] sm:$0xff]
        %v603 = vld [vmem:[%s5 + $0x70] sm:$0xff]
        %v604 = vld [vmem:[%s5 + $0x78] sm:$0xff]
        %v605 = vld [vmem:[%s6] sm:$0x3]
        %v607 = vlaneseq
        %v608 = vshrl.u32 %v607, 7
        %v609 = vsub.s32 0, %v608
        %v610 = vrot.slane %v605, %v609
        %v611 = vlaneseq
        %v612 = vshrl.u32 %v611, 7
        %v613 = vsub.s32 1, %v612
        %v614 = vrot.slane %v605, %v613
        %vm617 = vcmask 523264
        %v619 = vsel %vm617, %v570, 0
        %v622 = vsel %vm617, %v571, 0
        %v625 = vsel %vm617, %v572, 0
        %v628 = vsel %vm617, %v573, 0
        %v631 = vsel %vm617, %v574, 0
        %v634 = vsel %vm617, %v575, 0
        %v637 = vsel %vm617, %v576, 0
        %v640 = vsel %vm617, %v577, 0
        %v643 = vsel %vm617, %v578, 0
        %v646 = vsel %vm617, %v579, 0
        %v649 = vsel %vm617, %v580, 0
        %v652 = vsel %vm617, %v581, 0
        %v655 = vsel %vm617, %v582, 0
        %v658 = vsel %vm617, %v583, 0
        %v661 = vsel %vm617, %v584, 0
        %v664 = vsel %vm617, %v585, 0
        %v667 = vsel %vm617, %v586, 0
        %v670 = vsel %vm617, %v587, 0
        %v673 = vsel %vm617, %v588, 0
        %675 = vmatprep.subr.mxu0 0.0
        %676 = vmatpush1.msra.mxu0 0.0
        %677 = vmatprep.subr.mxu0 0.0
        %678 = vmatpush1.msra.mxu0 0.0
        %679 = vmatprep.subr.mxu0 0.0
        %680 = vmatpush1.msra.mxu0 0.0
        %681 = vmatprep.subr.mxu0 0.0
        %682 = vmatpush1.msra.mxu0 0.0
        %683 = vmatprep.subr.mxu0 0.0
        %684 = vmatpush1.msra.mxu0 0.0
        %685 = vmatprep.subr.mxu0 0.0
        %686 = vmatpush1.msra.mxu0 0.0
        %687 = vmatprep.subr.mxu0 0.0
        %688 = vmatpush1.msra.mxu0 0.0
        %689 = vmatprep.subr.mxu0 0.0
        %690 = vmatpush1.msra.mxu0 0.0
        %691 = vmatprep.subr.mxu0 %v604
        %692 = vmatpush1.msra.mxu0 %v603
        %693 = vmatprep.subr.mxu0 %v602
        %694 = vmatpush1.msra.mxu0 %v601
        %695 = vmatprep.subr.mxu0 %v600
        %696 = vmatpush1.msra.mxu0 %v599
        %697 = vmatprep.subr.mxu0 %v598
        %698 = vmatpush1.msra.mxu0 %v597
        %699 = vmatprep.subr.mxu0 %v596
        %700 = vmatpush1.msra.mxu0 %v595
        %701 = vmatprep.subr.mxu0 %v594
        %702 = vmatpush1.msra.mxu0 %v593
        %703 = vmatprep.subr.mxu0 %v592
        %704 = vmatpush1.msra.mxu0 %v591
        %705 = vmatprep.subr.mxu0 %v590
        %706 = vmatpush1.msra.mxu0 %v589
        %707 = vmatprep.subr.mxu0 0.0
        %708 = vmatpush2.msra.mxu0 0.0
        %709 = vmatprep.subr.mxu0 0.0
        %710 = vmatpush2.msra.mxu0 0.0
        %711 = vmatprep.subr.mxu0 0.0
        %712 = vmatpush2.msra.mxu0 0.0
        %713 = vmatprep.subr.mxu0 0.0
        %714 = vmatpush2.msra.mxu0 0.0
        %715 = vmatprep.subr.mxu0 0.0
        %716 = vmatpush2.msra.mxu0 0.0
        %717 = vmatprep.subr.mxu0 0.0
        %718 = vmatpush2.msra.mxu0 0.0
        %719 = vmatprep.subr.mxu0 0.0
        %720 = vmatpush2.msra.mxu0 0.0
        %721 = vmatprep.subr.mxu0 0.0
        %722 = vmatpush2.msra.mxu0 0.0
        %723 = vmatprep.subr.mxu0 0.0
        %724 = vmatpush2.msra.mxu0 0.0
        %725 = vmatprep.subr.mxu0 0.0
        %726 = vmatpush2.msra.mxu0 0.0
        %727 = vmatprep.subr.mxu0 0.0
        %728 = vmatpush2.msra.mxu0 0.0
        %729 = vmatprep.subr.mxu0 0.0
        %730 = vmatpush2.msra.mxu0 0.0
        %731 = vmatprep.subr.mxu0 0.0
        %732 = vmatpush2.msra.mxu0 0.0
        %733 = vmatprep.subr.mxu0 0.0
        %734 = vmatpush2.msra.mxu0 0.0
        %735 = vmatprep.subr.mxu0 0.0
        %736 = vmatpush2.msra.mxu0 0.0
        %737 = vmatprep.subr.mxu0 0.0
        %738 = vmatpush2.msra.mxu0 0.0
        %739 = vmatprep.mubr.f32.mxu0 0.0
        %740 = vmatmul.mubr.f32.gmra.mxu0 %v619
        %v741 = vpop.f32.mrf.mxu0
        %v742 = vadd.f32 %v610, %v741
        %v743 = vpop.f32.mrf.mxu0
        %v744 = vadd.f32 %v614, %v743
        %745 = vmatprep.mubr.f32.mxu0 0.0
        %746 = vmatmul.mubr.f32.gmra.mxu0 %v622
        %v747 = vpop.f32.mrf.mxu0
        %v748 = vadd.f32 %v610, %v747
        %v749 = vpop.f32.mrf.mxu0
        %v750 = vadd.f32 %v614, %v749
        %751 = vmatprep.mubr.f32.mxu0 0.0
        %752 = vmatmul.mubr.f32.gmra.mxu0 %v625
        %v753 = vpop.f32.mrf.mxu0
        %v754 = vadd.f32 %v610, %v753
        %v755 = vpop.f32.mrf.mxu0
        %v756 = vadd.f32 %v614, %v755
        %757 = vmatprep.mubr.f32.mxu0 0.0
        %758 = vmatmul.mubr.f32.gmra.mxu0 %v628
        %v759 = vpop.f32.mrf.mxu0
        %v760 = vadd.f32 %v610, %v759
        %v761 = vpop.f32.mrf.mxu0
        %v762 = vadd.f32 %v614, %v761
        %763 = vmatprep.mubr.f32.mxu0 0.0
        %764 = vmatmul.mubr.f32.gmra.mxu0 %v631
        %v765 = vpop.f32.mrf.mxu0
        %v766 = vadd.f32 %v610, %v765
        %v767 = vpop.f32.mrf.mxu0
        %v768 = vadd.f32 %v614, %v767
        %769 = vmatprep.mubr.f32.mxu0 0.0
        %770 = vmatmul.mubr.f32.gmra.mxu0 %v634
        %v771 = vpop.f32.mrf.mxu0
        %v772 = vadd.f32 %v610, %v771
        %v773 = vpop.f32.mrf.mxu0
        %v774 = vadd.f32 %v614, %v773
        %775 = vmatprep.mubr.f32.mxu0 0.0
        %776 = vmatmul.mubr.f32.gmra.mxu0 %v637
        %v777 = vpop.f32.mrf.mxu0
        %v778 = vadd.f32 %v610, %v777
        %v779 = vpop.f32.mrf.mxu0
        %v780 = vadd.f32 %v614, %v779
        %781 = vmatprep.mubr.f32.mxu0 0.0
        %782 = vmatmul.mubr.f32.gmra.mxu0 %v640
        %v783 = vpop.f32.mrf.mxu0
        %v784 = vadd.f32 %v610, %v783
        %v785 = vpop.f32.mrf.mxu0
        %v786 = vadd.f32 %v614, %v785
        %787 = vmatprep.mubr.f32.mxu0 0.0
        %788 = vmatmul.mubr.f32.gmra.mxu0 %v643
        %v789 = vpop.f32.mrf.mxu0
        %v790 = vadd.f32 %v610, %v789
        %v791 = vpop.f32.mrf.mxu0
        %v792 = vadd.f32 %v614, %v791
        %793 = vmatprep.mubr.f32.mxu0 0.0
        %794 = vmatmul.mubr.f32.gmra.mxu0 %v646
        %v795 = vpop.f32.mrf.mxu0
        %v796 = vadd.f32 %v610, %v795
        %v797 = vpop.f32.mrf.mxu0
        %v798 = vadd.f32 %v614, %v797
        %799 = vmatprep.mubr.f32.mxu0 0.0
        %800 = vmatmul.mubr.f32.gmra.mxu0 %v649
        %v801 = vpop.f32.mrf.mxu0
        %v802 = vadd.f32 %v610, %v801
        %v803 = vpop.f32.mrf.mxu0
        %v804 = vadd.f32 %v614, %v803
        %805 = vmatprep.mubr.f32.mxu0 0.0
        %806 = vmatmul.mubr.f32.gmra.mxu0 %v652
        %v807 = vpop.f32.mrf.mxu0
        %v808 = vadd.f32 %v610, %v807
        %v809 = vpop.f32.mrf.mxu0
        %v810 = vadd.f32 %v614, %v809
        %811 = vmatprep.mubr.f32.mxu0 0.0
        %812 = vmatmul.mubr.f32.gmra.mxu0 %v655
        %v813 = vpop.f32.mrf.mxu0
        %v814 = vadd.f32 %v610, %v813
        %v815 = vpop.f32.mrf.mxu0
        %v816 = vadd.f32 %v614, %v815
        %817 = vmatprep.mubr.f32.mxu0 0.0
        %818 = vmatmul.mubr.f32.gmra.mxu0 %v658
        %v819 = vpop.f32.mrf.mxu0
        %v820 = vadd.f32 %v610, %v819
        %v821 = vpop.f32.mrf.mxu0
        %v822 = vadd.f32 %v614, %v821
        %823 = vmatprep.mubr.f32.mxu0 0.0
        %824 = vmatmul.mubr.f32.gmra.mxu0 %v661
        %v825 = vpop.f32.mrf.mxu0
        %v826 = vadd.f32 %v610, %v825
        %v827 = vpop.f32.mrf.mxu0
        %v828 = vadd.f32 %v614, %v827
        %829 = vmatprep.mubr.f32.mxu0 0.0
        %830 = vmatmul.mubr.f32.gmra.mxu0 %v664
        %v831 = vpop.f32.mrf.mxu0
        %v832 = vadd.f32 %v610, %v831
        %v833 = vpop.f32.mrf.mxu0
        %v834 = vadd.f32 %v614, %v833
        %835 = vmatprep.mubr.f32.mxu0 0.0
        %836 = vmatmul.mubr.f32.gmra.mxu0 %v667
        %v837 = vpop.f32.mrf.mxu0
        %v838 = vadd.f32 %v610, %v837
        %v839 = vpop.f32.mrf.mxu0
        %v840 = vadd.f32 %v614, %v839
        %841 = vmatprep.mubr.f32.mxu0 0.0
        %842 = vmatmul.mubr.f32.gmra.mxu0 %v670
        %v843 = vpop.f32.mrf.mxu0
        %v844 = vadd.f32 %v610, %v843
        %v845 = vpop.f32.mrf.mxu0
        %v846 = vadd.f32 %v614, %v845
        %847 = vmatprep.mubr.f32.mxu0 0.0
        %848 = vmatmul.mubr.f32.gmra.mxu0 %v673
        %v849 = vpop.f32.mrf.mxu0
        %v850 = vadd.f32 %v610, %v849
        %v851 = vpop.f32.mrf.mxu0
        %v852 = vadd.f32 %v614, %v851
        %853 = vdwg.mxu0
        %v854 = vtanh.pop %v744
        %v855 = vtanh.pop %v750
        %v856 = vtanh.pop %v756
        %v857 = vtanh.pop %v762
        %v858 = vtanh.pop %v768
        %v859 = vtanh.pop %v774
        %v860 = vtanh.pop %v780
        %v861 = vtanh.pop %v786
        %v862 = vtanh.pop %v792
        %v863 = vtanh.pop %v798
        %v864 = vtanh.pop %v804
        %v865 = vtanh.pop %v810
        %v866 = vtanh.pop %v816
        %v867 = vtanh.pop %v822
        %v868 = vtanh.pop %v828
        %v869 = vtanh.pop %v834
        %v870 = vtanh.pop %v840
        %v871 = vtanh.pop %v846
        %v872 = vtanh.pop %v852
        %v873 = vsub.f32 0.0, %v854
        %v874 = vsub.f32 0.0, %v855
        %v875 = vsub.f32 0.0, %v856
        %v876 = vsub.f32 0.0, %v857
        %v877 = vsub.f32 0.0, %v858
        %v878 = vsub.f32 0.0, %v859
        %v879 = vsub.f32 0.0, %v860
        %v880 = vsub.f32 0.0, %v861
        %v881 = vsub.f32 0.0, %v862
        %v882 = vsub.f32 0.0, %v863
        %v883 = vsub.f32 0.0, %v864
        %v884 = vsub.f32 0.0, %v865
        %v885 = vsub.f32 0.0, %v866
        %v886 = vsub.f32 0.0, %v867
        %v887 = vsub.f32 0.0, %v868
        %v888 = vsub.f32 0.0, %v869
        %v889 = vsub.f32 0.0, %v870
        %v890 = vsub.f32 0.0, %v871
        %v891 = vsub.f32 0.0, %v872
        %v892 = vmul.f32 %v873, 1.442695
        %v893 = vpow.pop %v892
        %v894 = vmul.f32 %v874, 1.442695
        %v895 = vpow.pop %v894
        %v896 = vmul.f32 %v875, 1.442695
        %v897 = vpow.pop %v896
        %v898 = vmul.f32 %v876, 1.442695
        %v899 = vpow.pop %v898
        %v900 = vmul.f32 %v877, 1.442695
        %v901 = vpow.pop %v900
        %v902 = vmul.f32 %v878, 1.442695
        %v903 = vpow.pop %v902
        %v904 = vmul.f32 %v879, 1.442695
        %v905 = vpow.pop %v904
        %v906 = vmul.f32 %v880, 1.442695
        %v907 = vpow.pop %v906
        %v908 = vmul.f32 %v881, 1.442695
        %v909 = vpow.pop %v908
        %v910 = vmul.f32 %v882, 1.442695
        %v911 = vpow.pop %v910
        %v912 = vmul.f32 %v883, 1.442695
        %v913 = vpow.pop %v912
        %v914 = vmul.f32 %v884, 1.442695
        %v915 = vpow.pop %v914
        %v916 = vmul.f32 %v885, 1.442695
        %v917 = vpow.pop %v916
        %v918 = vmul.f32 %v886, 1.442695
        %v919 = vpow.pop %v918
        %v920 = vmul.f32 %v887, 1.442695
        %v921 = vpow.pop %v920
        %v922 = vmul.f32 %v888, 1.442695
        %v923 = vpow.pop %v922
        %v924 = vmul.f32 %v889, 1.442695
        %v925 = vpow.pop %v924
        %v926 = vmul.f32 %v890, 1.442695
        %v927 = vpow.pop %v926
        %v928 = vmul.f32 %v891, 1.442695
        %v929 = vpow.pop %v928
        %v930 = vld [vmem:[%s314] sm:$0xff]
        %v931 = vld [vmem:[%s314 + $0x8] sm:$0xff]
        %v932 = vld [vmem:[%s314 + $0x10] sm:$0xff]
        %v933 = vld [vmem:[%s314 + $0x18] sm:$0xff]
        %v934 = vld [vmem:[%s314 + $0x20] sm:$0xff]
        %v935 = vld [vmem:[%s314 + $0x28] sm:$0xff]
        %v936 = vld [vmem:[%s314 + $0x30] sm:$0xff]
        %v937 = vld [vmem:[%s314 + $0x38] sm:$0xff]
        %v938 = vld [vmem:[%s314 + $0x40] sm:$0xff]
        %v939 = vld [vmem:[%s314 + $0x48] sm:$0xff]
        %v940 = vld [vmem:[%s314 + $0x50] sm:$0xff]
        %v941 = vld [vmem:[%s314 + $0x58] sm:$0xff]
        %v942 = vld [vmem:[%s314 + $0x60] sm:$0xff]
        %v943 = vld [vmem:[%s314 + $0x68] sm:$0xff]
        %v944 = vld [vmem:[%s314 + $0x70] sm:$0xff]
        %v945 = vld [vmem:[%s314 + $0x78] sm:$0xff]
        %v946 = vld [vmem:[%s314 + $0x80] sm:$0xff]
        %v947 = vld [vmem:[%s314 + $0x88] sm:$0xff]
        %v948 = vld [vmem:[%s314 + $0x90] sm:$0xff]
        %v949 = vld [vmem:[%s320] sm:$0xff]
        %v950 = vld [vmem:[%s320 + $0x8] sm:$0xff]
        %v951 = vld [vmem:[%s320 + $0x10] sm:$0xff]
        %v952 = vld [vmem:[%s320 + $0x18] sm:$0xff]
        %v953 = vld [vmem:[%s320 + $0x20] sm:$0xff]
        %v954 = vld [vmem:[%s320 + $0x28] sm:$0xff]
        %v955 = vld [vmem:[%s320 + $0x30] sm:$0xff]
        %v956 = vld [vmem:[%s320 + $0x38] sm:$0xff]
        %v957 = vld [vmem:[%s320 + $0x40] sm:$0xff]
        %v958 = vld [vmem:[%s320 + $0x48] sm:$0xff]
        %v959 = vld [vmem:[%s320 + $0x50] sm:$0xff]
        %v960 = vld [vmem:[%s320 + $0x58] sm:$0xff]
        %v961 = vld [vmem:[%s320 + $0x60] sm:$0xff]
        %v962 = vld [vmem:[%s320 + $0x68] sm:$0xff]
        %v963 = vld [vmem:[%s320 + $0x70] sm:$0xff]
        %v964 = vld [vmem:[%s320 + $0x78] sm:$0xff]
        %v965 = vld [vmem:[%s320 + $0x80] sm:$0xff]
        %v966 = vld [vmem:[%s320 + $0x88] sm:$0xff]
        %v967 = vld [vmem:[%s320 + $0x90] sm:$0xff]
        %v968 = vsub.f32 %v930, %v949
        %v969 = vsub.f32 %v931, %v950
        %v970 = vsub.f32 %v932, %v951
        %v971 = vsub.f32 %v933, %v952
        %v972 = vsub.f32 %v934, %v953
        %v973 = vsub.f32 %v935, %v954
        %v974 = vsub.f32 %v936, %v955
        %v975 = vsub.f32 %v937, %v956
        %v976 = vsub.f32 %v938, %v957
        %v977 = vsub.f32 %v939, %v958
        %v978 = vsub.f32 %v940, %v959
        %v979 = vsub.f32 %v941, %v960
        %v980 = vsub.f32 %v942, %v961
        %v981 = vsub.f32 %v943, %v962
        %v982 = vsub.f32 %v944, %v963
        %v983 = vsub.f32 %v945, %v964
        %v984 = vsub.f32 %v946, %v965
        %v985 = vsub.f32 %v947, %v966
        %v986 = vsub.f32 %v948, %v967
        %v987 = vmul.f32 %v742, 2.0
        %v988 = vmul.f32 %v748, 2.0
        %v989 = vmul.f32 %v754, 2.0
        %v990 = vmul.f32 %v760, 2.0
        %v991 = vmul.f32 %v766, 2.0
        %v992 = vmul.f32 %v772, 2.0
        %v993 = vmul.f32 %v778, 2.0
        %v994 = vmul.f32 %v784, 2.0
        %v995 = vmul.f32 %v790, 2.0
        %v996 = vmul.f32 %v796, 2.0
        %v997 = vmul.f32 %v802, 2.0
        %v998 = vmul.f32 %v808, 2.0
        %v999 = vmul.f32 %v814, 2.0
        %v1000 = vmul.f32 %v820, 2.0
        %v1001 = vmul.f32 %v826, 2.0
        %v1002 = vmul.f32 %v832, 2.0
        %v1003 = vmul.f32 %v838, 2.0
        %v1004 = vmul.f32 %v844, 2.0
        %v1005 = vmul.f32 %v850, 2.0
        %v1006 = vsub.f32 %v987, %v930
        %v1007 = vsub.f32 %v988, %v931
        %v1008 = vsub.f32 %v989, %v932
        %v1009 = vsub.f32 %v990, %v933
        %v1010 = vsub.f32 %v991, %v934
        %v1011 = vsub.f32 %v992, %v935
        %v1012 = vsub.f32 %v993, %v936
        %v1013 = vsub.f32 %v994, %v937
        %v1014 = vsub.f32 %v995, %v938
        %v1015 = vsub.f32 %v996, %v939
        %v1016 = vsub.f32 %v997, %v940
        %v1017 = vsub.f32 %v998, %v941
        %v1018 = vsub.f32 %v999, %v942
        %v1019 = vsub.f32 %v1000, %v943
        %v1020 = vsub.f32 %v1001, %v944
        %v1021 = vsub.f32 %v1002, %v945
        %v1022 = vsub.f32 %v1003, %v946
        %v1023 = vsub.f32 %v1004, %v947
        %v1024 = vsub.f32 %v1005, %v948
        %v1025 = vsub.f32 %v1006, %v949
        %v1026 = vsub.f32 %v1007, %v950
        %v1027 = vsub.f32 %v1008, %v951
        %v1028 = vsub.f32 %v1009, %v952
        %v1029 = vsub.f32 %v1010, %v953
        %v1030 = vsub.f32 %v1011, %v954
        %v1031 = vsub.f32 %v1012, %v955
        %v1032 = vsub.f32 %v1013, %v956
        %v1033 = vsub.f32 %v1014, %v957
        %v1034 = vsub.f32 %v1015, %v958
        %v1035 = vsub.f32 %v1016, %v959
        %v1036 = vsub.f32 %v1017, %v960
        %v1037 = vsub.f32 %v1018, %v961
        %v1038 = vsub.f32 %v1019, %v962
        %v1039 = vsub.f32 %v1020, %v963
        %v1040 = vsub.f32 %v1021, %v964
        %v1041 = vsub.f32 %v1022, %v965
        %v1042 = vsub.f32 %v1023, %v966
        %v1043 = vsub.f32 %v1024, %v967
        %v1044 = vmul.f32 %v968, %v1025
        %v1045 = vmul.f32 %v969, %v1026
        %v1046 = vmul.f32 %v970, %v1027
        %v1047 = vmul.f32 %v971, %v1028
        %v1048 = vmul.f32 %v972, %v1029
        %v1049 = vmul.f32 %v973, %v1030
        %v1050 = vmul.f32 %v974, %v1031
        %v1051 = vmul.f32 %v975, %v1032
        %v1052 = vmul.f32 %v976, %v1033
        %v1053 = vmul.f32 %v977, %v1034
        %v1054 = vmul.f32 %v978, %v1035
        %v1055 = vmul.f32 %v979, %v1036
        %v1056 = vmul.f32 %v980, %v1037
        %v1057 = vmul.f32 %v981, %v1038
        %v1058 = vmul.f32 %v982, %v1039
        %v1059 = vmul.f32 %v983, %v1040
        %v1060 = vmul.f32 %v984, %v1041
        %v1061 = vmul.f32 %v985, %v1042
        %v1062 = vmul.f32 %v986, %v1043
        %v1063 = vmul.f32 %v1044, %v893
        %v1064 = vmul.f32 %v1045, %v895
        %v1065 = vmul.f32 %v1046, %v897
        %v1066 = vmul.f32 %v1047, %v899
        %v1067 = vmul.f32 %v1048, %v901
        %v1068 = vmul.f32 %v1049, %v903
        %v1069 = vmul.f32 %v1050, %v905
        %v1070 = vmul.f32 %v1051, %v907
        %v1071 = vmul.f32 %v1052, %v909
        %v1072 = vmul.f32 %v1053, %v911
        %v1073 = vmul.f32 %v1054, %v913
        %v1074 = vmul.f32 %v1055, %v915
        %v1075 = vmul.f32 %v1056, %v917
        %v1076 = vmul.f32 %v1057, %v919
        %v1077 = vmul.f32 %v1058, %v921
        %v1078 = vmul.f32 %v1059, %v923
        %v1079 = vmul.f32 %v1060, %v925
        %v1080 = vmul.f32 %v1061, %v927
        %v1081 = vmul.f32 %v1062, %v929
        %s1082 = smul.u32 %s21, 152
        %v1083 = vlaneseq
        %v1084 = vshrl.u32 %v1083, 7
        %v1085 = vadd.s32 %v1084, 8
        %v1086 = vadd.s32 %v1084, 16
        %v1087 = vadd.s32 %v1084, 24
        %v1088 = vadd.s32 %v1084, 32
        %v1089 = vadd.s32 %v1084, 40
        %v1090 = vadd.s32 %v1084, 48
        %v1091 = vadd.s32 %v1084, 56
        %v1092 = vadd.s32 %v1084, 64
        %v1093 = vadd.s32 %v1084, 72
        %v1094 = vadd.s32 %v1084, 80
        %v1095 = vadd.s32 %v1084, 88
        %v1096 = vadd.s32 %v1084, 96
        %v1097 = vadd.s32 %v1084, 104
        %v1098 = vadd.s32 %v1084, 112
        %v1099 = vadd.s32 %v1084, 120
        %v1100 = vadd.s32 %v1084, 128
        %v1101 = vadd.s32 %v1084, 136
        %v1102 = vadd.s32 %v1084, 144
        %v1103 = vstv %s1082
        %v1104 = vadd.s32 %v1103, %v1084
        %v1105 = vadd.s32 %v1103, %v1085
        %v1106 = vadd.s32 %v1103, %v1086
        %v1107 = vadd.s32 %v1103, %v1087
        %v1108 = vadd.s32 %v1103, %v1088
        %v1109 = vadd.s32 %v1103, %v1089
        %v1110 = vadd.s32 %v1103, %v1090
        %v1111 = vadd.s32 %v1103, %v1091
        %v1112 = vadd.s32 %v1103, %v1092
        %v1113 = vadd.s32 %v1103, %v1093
        %v1114 = vadd.s32 %v1103, %v1094
        %v1115 = vadd.s32 %v1103, %v1095
        %v1116 = vadd.s32 %v1103, %v1096
        %v1117 = vadd.s32 %v1103, %v1097
        %v1118 = vadd.s32 %v1103, %v1098
        %v1119 = vadd.s32 %v1103, %v1099
        %v1120 = vadd.s32 %v1103, %v1100
        %v1121 = vadd.s32 %v1103, %v1101
        %v1122 = vadd.s32 %v1103, %v1102
        %vm1123 = vcmp.lt.s32.totalorder %v1104, 300
        %vm1124 = vcmp.lt.s32.totalorder %v1105, 300
        %vm1125 = vcmp.lt.s32.totalorder %v1106, 300
        %vm1126 = vcmp.lt.s32.totalorder %v1107, 300
        %vm1127 = vcmp.lt.s32.totalorder %v1108, 300
        %vm1128 = vcmp.lt.s32.totalorder %v1109, 300
        %vm1129 = vcmp.lt.s32.totalorder %v1110, 300
        %vm1130 = vcmp.lt.s32.totalorder %v1111, 300
        %vm1131 = vcmp.lt.s32.totalorder %v1112, 300
        %vm1132 = vcmp.lt.s32.totalorder %v1113, 300
        %vm1133 = vcmp.lt.s32.totalorder %v1114, 300
        %vm1134 = vcmp.lt.s32.totalorder %v1115, 300
        %vm1135 = vcmp.lt.s32.totalorder %v1116, 300
        %vm1136 = vcmp.lt.s32.totalorder %v1117, 300
        %vm1137 = vcmp.lt.s32.totalorder %v1118, 300
        %vm1138 = vcmp.lt.s32.totalorder %v1119, 300
        %vm1139 = vcmp.lt.s32.totalorder %v1120, 300
        %vm1140 = vcmp.lt.s32.totalorder %v1121, 300
        %vm1141 = vcmp.lt.s32.totalorder %v1122, 300
        %v1142 = vsel %vm1123, 1, 0
        %v1143 = vsel %vm1124, 1, 0
        %v1144 = vsel %vm1125, 1, 0
        %v1145 = vsel %vm1126, 1, 0
        %v1146 = vsel %vm1127, 1, 0
        %v1147 = vsel %vm1128, 1, 0
        %v1148 = vsel %vm1129, 1, 0
        %v1149 = vsel %vm1130, 1, 0
        %v1150 = vsel %vm1131, 1, 0
        %v1151 = vsel %vm1132, 1, 0
        %v1152 = vsel %vm1133, 1, 0
        %v1153 = vsel %vm1134, 1, 0
        %v1154 = vsel %vm1135, 1, 0
        %v1155 = vsel %vm1136, 1, 0
        %v1156 = vsel %vm1137, 1, 0
        %v1157 = vsel %vm1138, 1, 0
        %v1158 = vsel %vm1139, 1, 0
        %v1159 = vsel %vm1140, 1, 0
        %v1160 = vsel %vm1141, 1, 0
        %vm1161 = vcmp.eq.s32.totalorder %v1142, 1
        %vm1162 = vcmp.eq.s32.totalorder %v1143, 1
        %vm1163 = vcmp.eq.s32.totalorder %v1144, 1
        %vm1164 = vcmp.eq.s32.totalorder %v1145, 1
        %vm1165 = vcmp.eq.s32.totalorder %v1146, 1
        %vm1166 = vcmp.eq.s32.totalorder %v1147, 1
        %vm1167 = vcmp.eq.s32.totalorder %v1148, 1
        %vm1168 = vcmp.eq.s32.totalorder %v1149, 1
        %vm1169 = vcmp.eq.s32.totalorder %v1150, 1
        %vm1170 = vcmp.eq.s32.totalorder %v1151, 1
        %vm1171 = vcmp.eq.s32.totalorder %v1152, 1
        %vm1172 = vcmp.eq.s32.totalorder %v1153, 1
        %vm1173 = vcmp.eq.s32.totalorder %v1154, 1
        %vm1174 = vcmp.eq.s32.totalorder %v1155, 1
        %vm1175 = vcmp.eq.s32.totalorder %v1156, 1
        %vm1176 = vcmp.eq.s32.totalorder %v1157, 1
        %vm1177 = vcmp.eq.s32.totalorder %v1158, 1
        %vm1178 = vcmp.eq.s32.totalorder %v1159, 1
        %vm1179 = vcmp.eq.s32.totalorder %v1160, 1
        %v1180 = vsel %vm1161, %v1063, 0.0
        %v1181 = vsel %vm1162, %v1064, 0.0
        %v1182 = vsel %vm1163, %v1065, 0.0
        %v1183 = vsel %vm1164, %v1066, 0.0
        %v1184 = vsel %vm1165, %v1067, 0.0
        %v1185 = vsel %vm1166, %v1068, 0.0
        %v1186 = vsel %vm1167, %v1069, 0.0
        %v1187 = vsel %vm1168, %v1070, 0.0
        %v1188 = vsel %vm1169, %v1071, 0.0
        %v1189 = vsel %vm1170, %v1072, 0.0
        %v1190 = vsel %vm1171, %v1073, 0.0
        %v1191 = vsel %vm1172, %v1074, 0.0
        %v1192 = vsel %vm1173, %v1075, 0.0
        %v1193 = vsel %vm1174, %v1076, 0.0
        %v1194 = vsel %vm1175, %v1077, 0.0
        %v1195 = vsel %vm1176, %v1078, 0.0
        %v1196 = vsel %vm1177, %v1079, 0.0
        %v1197 = vsel %vm1178, %v1080, 0.0
        %v1198 = vsel %vm1179, %v1081, 0.0
        %vm1199 = vcmask 130048
        %v1200 = vsel %vm1199, %v1180, 0.0
        %v1201 = vsel %vm1199, %v1181, 0.0
        %v1202 = vadd.f32 %v1200, %v1201
        %v1203 = vsel %vm1199, %v1182, 0.0
        %v1204 = vadd.f32 %v1202, %v1203
        %v1205 = vsel %vm1199, %v1183, 0.0
        %v1206 = vadd.f32 %v1204, %v1205
        %v1207 = vsel %vm1199, %v1184, 0.0
        %v1208 = vadd.f32 %v1206, %v1207
        %v1209 = vsel %vm1199, %v1185, 0.0
        %v1210 = vadd.f32 %v1208, %v1209
        %v1211 = vsel %vm1199, %v1186, 0.0
        %v1212 = vadd.f32 %v1210, %v1211
        %v1213 = vsel %vm1199, %v1187, 0.0
        %v1214 = vadd.f32 %v1212, %v1213
        %v1215 = vsel %vm1199, %v1188, 0.0
        %v1216 = vadd.f32 %v1214, %v1215
        %v1217 = vsel %vm1199, %v1189, 0.0
        %v1218 = vadd.f32 %v1216, %v1217
        %v1219 = vsel %vm1199, %v1190, 0.0
        %v1220 = vadd.f32 %v1218, %v1219
        %v1221 = vsel %vm1199, %v1191, 0.0
        %v1222 = vadd.f32 %v1220, %v1221
        %v1223 = vsel %vm1199, %v1192, 0.0
        %v1224 = vadd.f32 %v1222, %v1223
        %v1225 = vsel %vm1199, %v1193, 0.0
        %v1226 = vadd.f32 %v1224, %v1225
        %v1227 = vsel %vm1199, %v1194, 0.0
        %v1228 = vadd.f32 %v1226, %v1227
        %v1229 = vsel %vm1199, %v1195, 0.0
        %v1230 = vadd.f32 %v1228, %v1229
        %v1231 = vsel %vm1199, %v1196, 0.0
        %v1232 = vadd.f32 %v1230, %v1231
        %v1233 = vsel %vm1199, %v1197, 0.0
        %v1234 = vadd.f32 %v1232, %v1233
        %v1235 = vsel %vm1199, %v1198, 0.0
        %v1236 = vadd.f32 %v1234, %v1235
        %1237 = vadd.xlane.f32.xlu0 %v1236
        %v1238 = vpop.xlane.xlu0 %1237
        %v1239 = vrot.slane %v1238, 4
        %v1240 = vadd.f32 %v1238, %v1239
        %v1241 = vrot.slane %v1240, 2
        %v1242 = vadd.f32 %v1240, %v1241
        %v1243 = vrot.slane %v1242, 1
        %v1244 = vadd.f32 %v1242, %v1243
        %s1245 = vtos %v1244
        %v1246 = vstv %s1245
        %1247 = vst [vmem:[%s303] sm:$0x1] %v1246
        %s1248 = sand.u32 %s191, 1
        %s1249 = scalar_lea.sflag [#allocation3], %s1248
        %s1250 = sand.u32 %s191, 1
        %s1251 = scalar_lea.vmem [#allocation2], %s1250
        // Predicated region
        $region49: #{tpu_custom_call.1} parent=47 // pred_check
          %p1252 = pneg %p201
        $region50: #{tpu_custom_call.1} parent=47 // pred_check_branch
          %1254 = sbr.rel (%p1252) target = $region52
        $region51: #{tpu_custom_call.1} parent=47 // pred_region
          %s1256 = ssub.s32 16, 16
          %1257 = vsyncadd %s1249, %s1256
          %s1258 = smul.addr %s21, 16
          %s1259 = scalar_lea.hbm %s7, %s1258
          %s1261 = sshll.u32 %s1251, 4
          %s1262 = int_to_ptr.vmem [resolvable:$true] %s1261
          %1264 = dma.vmem_to_hbm [thread:$0]  %s1262, 16, %s1259, %s1249
        $region52: #{tpu_custom_call.1} parent=47 // pred_fallthru
          _
      $region48: #{tpu_custom_call.1} parent=5 // pred_fallthru
        _
      %p1265 = scmp.le.s32.totalorder 2, %s16
      // Predicated region
      $region53: #{tpu_custom_call.1} parent=5 // pred_check
        %p1266 = pneg %p1265
      $region54: #{tpu_custom_call.1} parent=5 // pred_check_branch
        %1268 = sbr.rel (%p1266) target = $region56
      $region55: #{tpu_custom_call.1} parent=5 // pred_region
        %s1269 = ssub.s32 %s16, 2
        // Predicated region
        $region57: #{tpu_custom_call.1} parent=55 // pred_check
          %p1270 = pneg %p207
        $region58: #{tpu_custom_call.1} parent=55 // pred_check_branch
          %1272 = sbr.rel (%p1270) target = $region60
        $region59: #{tpu_custom_call.1} parent=55 // pred_region
          %s1273 = sand.u32 %s192, 1
          %s1274 = scalar_lea.sflag [#allocation3], %s1273
          %s1275 = sand.u32 %s192, 1
          %s1276 = scalar_lea.vmem [#allocation2], %s1275
          %1277 = dma.done %s1274, 16
        $region60: #{tpu_custom_call.1} parent=55 // pred_fallthru
          _
      $region56: #{tpu_custom_call.1} parent=5 // pred_fallthru
        _
    $region6: #{tpu_custom_call.1} parent=1 // loop_footer
      %s20 = sadd.s32 1, %s16
    $region7: #{tpu_custom_call.1} parent=1 // loop_footer_branch
      %15 = sbr.rel target = $region3
    $region8: #{tpu_custom_call.1} parent=1 // loop_exit
      _
    %1278 = vsyncpa [#allocation3], 1
    %s1279 = scalar_lea.sflag [#allocation3], 1
    %1280 = vsyncpa %s1279, 1

</llo_original>
